<compile_context>
chip_gen: v5e
topology: v5e:2x2
jax: 0.10.0
libtpu: 0.0.40
codegen_flags: <defaults>
</compile_context>

<pallas_src>
import functools

import jax
import jax.numpy as jnp
from jax.experimental import pallas as pl
from jax.experimental.pallas import tpu as pltpu

HIDDEN = 50
HPAD = 64  # hidden width zero-padded for clean (8,128)-friendly layouts


def sinenet_kernel(x_ref, w1_ref, b1_ref, w2_ref, b2_ref, w3_ref, b3_ref, o_ref):
    # x_ref: (1, TN) -- batch on lanes, fully dense.
    x = x_ref[...]

    # Layer 1: degenerate K=1 contraction -> VPU broadcast FMA, skip the MXU.
    h1 = jnp.maximum(w1_ref[...] * x + b1_ref[...], 0.0)            # (HPAD, TN)

    # Layer 2: the only real matmul; (HPAD,HPAD) @ (HPAD,TN) on the MXU.
    h1c = h1.astype(w2_ref.dtype)  # bf16 path on v6e/v7x; no-op for f32 weights
    h2 = jnp.dot(w2_ref[...], h1c, preferred_element_type=jnp.float32) + b2_ref[...]
    h2 = jnp.maximum(h2, 0.0)                                        # (HPAD, TN)

    # Layer 3: single output feature -> weighted feature-axis (sublane) reduce,
    # result stays lane-dense (1, TN) -> unmasked vst.
    out = jnp.sum(w3_ref[...] * h2, axis=0, keepdims=True) + b3_ref[...]
    o_ref[...] = out.astype(o_ref.dtype)


def _pack_params(params, *, w2_dtype=jnp.float32):
    """Transpose to feature-major and zero-pad hidden dim 50 -> HPAD (exact)."""
    w1, b1 = params["w1"], params["b1"]   # (1,50), (1,50)
    w2, b2 = params["w2"], params["b2"]   # (50,50), (1,50)
    w3, b3 = params["w3"], params["b3"]   # (50,1), (1,1)
    h = w1.shape[1]

    w1c = jnp.zeros((HPAD, 1), jnp.float32).at[:h, 0].set(w1[0])
    b1c = jnp.zeros((HPAD, 1), jnp.float32).at[:h, 0].set(b1[0])
    w2t = jnp.zeros((HPAD, HPAD), jnp.float32).at[:h, :h].set(w2.T).astype(w2_dtype)
    b2c = jnp.zeros((HPAD, 1), jnp.float32).at[:h, 0].set(b2[0])
    w3c = jnp.zeros((HPAD, 1), jnp.float32).at[:h, 0].set(w3[:, 0])
    b3c = b3.reshape(1, 1).astype(jnp.float32)
    return w1c, b1c, w2t, b2c, w3c, b3c


@functools.partial(jax.jit, static_argnames=("tile_n", "use_bf16"))
def sinenet_forward(x, params, *, tile_n=512, use_bf16=False):
    """x: (N, 1) float32. params: dict of w1,b1,w2,b2,w3,b3 in (in, out) layout."""
    N, F = x.shape
    assert F == 1
    # Batch tile feeding the MXU: multiple of 256 (v6e/v7x array width; 128-ok too).
    assert tile_n % 256 == 0

    # Reorient: batch goes on the lane axis; zero-pad N to a multiple of tile_n.
    n_pad = pl.cdiv(N, tile_n) * tile_n
    xt = jnp.zeros((1, n_pad), x.dtype).at[0, :N].set(x[:, 0])

    w2_dtype = jnp.bfloat16 if use_bf16 else jnp.float32
    w1c, b1c, w2t, b2c, w3c, b3c = _pack_params(params, w2_dtype=w2_dtype)

    grid = (n_pad // tile_n,)
    # Constant index_map -> block never changes -> weights resident in VMEM.
    resident = lambda arr: pl.BlockSpec(arr.shape, lambda i: (0, 0))

    yt = pl.pallas_call(
        sinenet_kernel,
        out_shape=jax.ShapeDtypeStruct((1, n_pad), x.dtype),
        grid=grid,
        in_specs=[
            pl.BlockSpec((1, tile_n), lambda i: (0, i)),   # x tile, lane-dense
            resident(w1c), resident(b1c),
            resident(w2t), resident(b2c),
            resident(w3c), resident(b3c),
        ],
        out_specs=pl.BlockSpec((1, tile_n), lambda i: (0, i)),
        compiler_params=pltpu.CompilerParams(
            dimension_semantics=("parallel",),
        ),
    )(xt, w1c, b1c, w2t, b2c, w3c, b3c)

    return yt[0, :N].reshape(N, 1)


def init_params(key):
    """nn.Linear-style init, weights stored transposed as (in, out),
    uniform(-1/sqrt(fan_in), 1/sqrt(fan_in)) like PyTorch's default."""
    ks = jax.random.split(key, 6)

    def lin(kw, kb, fan_in, fan_out):
        bound = 1.0 / jnp.sqrt(jnp.float32(fan_in))
        w = jax.random.uniform(kw, (fan_in, fan_out), jnp.float32, -bound, bound)
        b = jax.random.uniform(kb, (1, fan_out), jnp.float32, -bound, bound)
        return w, b

    w1, b1 = lin(ks[0], ks[1], 1, HIDDEN)
    w2, b2 = lin(ks[2], ks[3], HIDDEN, HIDDEN)
    w3, b3 = lin(ks[4], ks[5], HIDDEN, 1)
    return dict(w1=w1, b1=b1, w2=w2, b2=b2, w3=w3, b3=b3)


def sinenet_ref(x, p):
    h = jnp.maximum(x @ p["w1"] + p["b1"], 0.0)
    h = jnp.maximum(h @ p["w2"] + p["b2"], 0.0)
    return h @ p["w3"] + p["b3"]


if __name__ == "__main__":
    key = jax.random.PRNGKey(0)
    params = init_params(key)

    # Mirror the original usage: 1000 scalar points in [0, 2*pi], shape (N, 1).
    N = 1000
    x = jnp.linspace(0.0, 2.0 * jnp.pi, N, dtype=jnp.float32).reshape(N, 1)

    y = sinenet_forward(x, params)          # f32 path -> exact vs. reference
    y = jax.block_until_ready(y)

    y_ref = sinenet_ref(x, params)
    assert y.shape == (N, 1)
    assert jnp.allclose(y, y_ref, atol=1e-5, rtol=1e-5)

    print("KERNEL_OK")
</pallas_src>

<mosaic_0001>
module attributes {stable_mosaic.version = 11 : i64} {
  func.func @sinenet_kernel(%arg0: i32, %arg1: memref<1x512xf32, #tpu.memory_space<vmem>>, %arg2: memref<64x1xf32, #tpu.memory_space<vmem>>, %arg3: memref<64x1xf32, #tpu.memory_space<vmem>>, %arg4: memref<64x64xf32, #tpu.memory_space<vmem>>, %arg5: memref<64x1xf32, #tpu.memory_space<vmem>>, %arg6: memref<64x1xf32, #tpu.memory_space<vmem>>, %arg7: memref<1x1xf32, #tpu.memory_space<vmem>>, %arg8: memref<1x512xf32, #tpu.memory_space<vmem>>) attributes {dimension_semantics = [#tpu.dimension_semantics<parallel>], iteration_bounds = array<i64: 2>, scalar_prefetch = 0 : i64, scratch_operands = 0 : i64, tpu.core_type = #tpu.core_type<tc>, window_params = [{transform_indices = @transform_0, window_bounds = array<i64: 1, 512>}, {pipeline_mode = #tpu.pipeline_mode<synchronous>, transform_indices = @transform_1, window_bounds = array<i64: 64, 1>}, {pipeline_mode = #tpu.pipeline_mode<synchronous>, transform_indices = @transform_2, window_bounds = array<i64: 64, 1>}, {pipeline_mode = #tpu.pipeline_mode<synchronous>, transform_indices = @transform_3, window_bounds = array<i64: 64, 64>}, {pipeline_mode = #tpu.pipeline_mode<synchronous>, transform_indices = @transform_4, window_bounds = array<i64: 64, 1>}, {pipeline_mode = #tpu.pipeline_mode<synchronous>, transform_indices = @transform_5, window_bounds = array<i64: 64, 1>}, {pipeline_mode = #tpu.pipeline_mode<synchronous>, transform_indices = @transform_6, window_bounds = array<i64: 1, 1>}, {transform_indices = @transform_7, window_bounds = array<i64: 1, 512>}]} {
    %c0 = arith.constant 0 : index
    %c0_0 = arith.constant 0 : index
    %0 = vector.load %arg1[%c0, %c0_0] : memref<1x512xf32, #tpu.memory_space<vmem>>, vector<1x512xf32>
    %c0_1 = arith.constant 0 : index
    %c0_2 = arith.constant 0 : index
    %1 = vector.load %arg2[%c0_1, %c0_2] : memref<64x1xf32, #tpu.memory_space<vmem>>, vector<64x1xf32>
    %2 = vector.broadcast %1 : vector<64x1xf32> to vector<64x512xf32>
    %3 = vector.broadcast %0 : vector<1x512xf32> to vector<64x512xf32>
    %4 = arith.mulf %2, %3 : vector<64x512xf32>
    %c0_3 = arith.constant 0 : index
    %c0_4 = arith.constant 0 : index
    %5 = vector.load %arg3[%c0_3, %c0_4] : memref<64x1xf32, #tpu.memory_space<vmem>>, vector<64x1xf32>
    %6 = vector.broadcast %5 : vector<64x1xf32> to vector<64x512xf32>
    %7 = arith.addf %4, %6 : vector<64x512xf32>
    %cst = arith.constant 0.000000e+00 : f32
    %8 = vector.broadcast %cst : f32 to vector<64x512xf32>
    %9 = arith.maximumf %7, %8 : vector<64x512xf32>
    %c0_5 = arith.constant 0 : index
    %c0_6 = arith.constant 0 : index
    %10 = vector.load %arg4[%c0_5, %c0_6] : memref<64x64xf32, #tpu.memory_space<vmem>>, vector<64x64xf32>
    %cst_7 = arith.constant dense<0.000000e+00> : vector<64x512xf32>
    %11 = tpu.matmul %10, %9, %cst_7 {dimension_numbers = #tpu.dot_dimension_numbers<[1], [0], [0], [1], [0, 0, 1, 1], [], []>} : vector<64x64xf32>, vector<64x512xf32>, vector<64x512xf32> -> vector<64x512xf32>
    %c0_8 = arith.constant 0 : index
    %c0_9 = arith.constant 0 : index
    %12 = vector.load %arg5[%c0_8, %c0_9] : memref<64x1xf32, #tpu.memory_space<vmem>>, vector<64x1xf32>
    %13 = vector.broadcast %12 : vector<64x1xf32> to vector<64x512xf32>
    %14 = arith.addf %11, %13 : vector<64x512xf32>
    %cst_10 = arith.constant 0.000000e+00 : f32
    %15 = vector.broadcast %cst_10 : f32 to vector<64x512xf32>
    %16 = arith.maximumf %14, %15 : vector<64x512xf32>
    %c0_11 = arith.constant 0 : index
    %c0_12 = arith.constant 0 : index
    %17 = vector.load %arg6[%c0_11, %c0_12] : memref<64x1xf32, #tpu.memory_space<vmem>>, vector<64x1xf32>
    %18 = vector.broadcast %17 : vector<64x1xf32> to vector<64x512xf32>
    %19 = arith.mulf %18, %16 : vector<64x512xf32>
    %cst_13 = arith.constant dense<0.000000e+00> : vector<512xf32>
    %20 = vector.multi_reduction <add>, %19, %cst_13 [0] : vector<64x512xf32> to vector<512xf32>
    %21 = vector.shape_cast %20 : vector<512xf32> to vector<1x512xf32>
    %c0_14 = arith.constant 0 : index
    %c0_15 = arith.constant 0 : index
    %22 = vector.load %arg7[%c0_14, %c0_15] : memref<1x1xf32, #tpu.memory_space<vmem>>, vector<1x1xf32>
    %23 = vector.broadcast %22 : vector<1x1xf32> to vector<1x512xf32>
    %24 = arith.addf %21, %23 : vector<1x512xf32>
    %c0_16 = arith.constant 0 : index
    %c0_17 = arith.constant 0 : index
    %25 = vector.load %arg8[%c0_16, %c0_17] : memref<1x512xf32, #tpu.memory_space<vmem>>, vector<1x512xf32>
    tpu.vector_store %arg8[%c0_16, %c0_17], %24 {strides = array<i32>} : memref<1x512xf32, #tpu.memory_space<vmem>>, vector<1x512xf32>,
    return
  }
  func.func @transform_0(%arg0: i32) -> (i32, i32) {
    %c0_i32 = arith.constant 0 : i32
    %c0_i32_0 = arith.constant 0 : i32
    return %c0_i32, %arg0 : i32, i32
  }
  func.func @transform_1(%arg0: i32) -> (i32, i32) {
    %c0_i32 = arith.constant 0 : i32
    %c0_i32_0 = arith.constant 0 : i32
    %c0_i32_1 = arith.constant 0 : i32
    return %c0_i32, %c0_i32_0 : i32, i32
  }
  func.func @transform_2(%arg0: i32) -> (i32, i32) {
    %c0_i32 = arith.constant 0 : i32
    %c0_i32_0 = arith.constant 0 : i32
    %c0_i32_1 = arith.constant 0 : i32
    return %c0_i32, %c0_i32_0 : i32, i32
  }
  func.func @transform_3(%arg0: i32) -> (i32, i32) {
    %c0_i32 = arith.constant 0 : i32
    %c0_i32_0 = arith.constant 0 : i32
    %c0_i32_1 = arith.constant 0 : i32
    return %c0_i32, %c0_i32_0 : i32, i32
  }
  func.func @transform_4(%arg0: i32) -> (i32, i32) {
    %c0_i32 = arith.constant 0 : i32
    %c0_i32_0 = arith.constant 0 : i32
    %c0_i32_1 = arith.constant 0 : i32
    return %c0_i32, %c0_i32_0 : i32, i32
  }
  func.func @transform_5(%arg0: i32) -> (i32, i32) {
    %c0_i32 = arith.constant 0 : i32
    %c0_i32_0 = arith.constant 0 : i32
    %c0_i32_1 = arith.constant 0 : i32
    return %c0_i32, %c0_i32_0 : i32, i32
  }
  func.func @transform_6(%arg0: i32) -> (i32, i32) {
    %c0_i32 = arith.constant 0 : i32
    %c0_i32_0 = arith.constant 0 : i32
    %c0_i32_1 = arith.constant 0 : i32
    return %c0_i32, %c0_i32_0 : i32, i32
  }
  func.func @transform_7(%arg0: i32) -> (i32, i32) {
    %c0_i32 = arith.constant 0 : i32
    %c0_i32_0 = arith.constant 0 : i32
    return %c0_i32, %arg0 : i32, i32
  }
}

</mosaic_0001>

<llo_original>
// kernel: sinenet_forward.1
$region0: #{sinenet_forward.1}
  #allocation0 [shape = 'u32[]', space=smem, size = 0x4, offset = 0x4, fixed_abs, tag = 'smem constant byte address 0x4 - core index']
  #allocation1 [shape = 'u32[72,128]{1,0:T(1,128)}', space=vmem, size = 0x9000, scoped, tag = 'internal scratch']
  #allocation2 [shape = 'f32[1,1]{1,0:T(1,128)S(1)}', space=vmem, size = 0x200, scoped, tag = 'scoped memory for sinenet_forward.1']
  %s0 = inlined_call_operand.vmem [shape: f32[1,1024], index: 0, kind: input, shape index: {}]
  %s1 = inlined_call_operand.vmem [shape: f32[64,1], index: 1, kind: input, shape index: {}]
  %s2 = inlined_call_operand.vmem [shape: f32[64,1], index: 2, kind: input, shape index: {}]
  %s3 = inlined_call_operand.vmem [shape: f32[64,64], index: 3, kind: input, shape index: {}]
  %s4 = inlined_call_operand.vmem [shape: f32[64,1], index: 4, kind: input, shape index: {}]
  %s5 = inlined_call_operand.vmem [shape: f32[64,1], index: 5, kind: input, shape index: {}]
  %s6 = inlined_call_operand.<no memory space> [shape: f32[1,1], index: 6, kind: input, shape index: {}]
  %s7 = inlined_call_operand.vmem [shape: f32[1,1024], index: 7, kind: output, shape index: {}]
  %s8 = sld [smem:[#allocation0]]
  $region61: #{sinenet_forward.1} parent=0
    _
  %s10 = ssub.s32 1, %s8
  %s11 = scalar_select 0, %s10, %s8
  %v12 = vstv %s6
  %13 = vst [vmem:[#allocation2] sm:$0x1] %v12
  loop: start=0, step=1, limit=4
  $region2: #{sinenet_forward.1} parent=0 // loop_pre_header
    _
  $region3: #{sinenet_forward.1} parent=0 // loop_header
    %s15 = sphi 0, %s19
    %p16 = scmp.ge.s32.totalorder %s15, 4
    %s25 = sphi 0, %s27
    %s28 = sphi 0, %s25
    %s29 = sphi 0, %s28
    %s45 = sphi 0, %s29
    %s49 = sphi 0, %s49
    %s51 = sphi 0, %s49
    %s52 = sphi 0, %s51
    %s66 = sphi 0, %s52
    %s70 = sphi 0, %s70
    %s72 = sphi 0, %s70
    %s73 = sphi 0, %s72
    %s87 = sphi 0, %s73
    %s91 = sphi 0, %s91
    %s93 = sphi 0, %s91
    %s94 = sphi 0, %s93
    %s108 = sphi 0, %s94
    %s112 = sphi 0, %s112
    %s114 = sphi 0, %s112
    %s115 = sphi 0, %s114
    %s129 = sphi 0, %s115
    %s133 = sphi 0, %s133
    %s135 = sphi 0, %s133
    %s136 = sphi 0, %s135
    %s150 = sphi 0, %s136
    %s154 = sphi 0, %s154
    %s156 = sphi 0, %s154
    %s157 = sphi 0, %s156
    %s171 = sphi 0, %s157
    %s177 = sphi 0, %s179
    %s180 = sphi 0, %s177
    %s181 = sphi 0, %s180
    %s197 = sphi 0, %s181
  $region4: #{sinenet_forward.1} parent=0 // loop_header_branch
    %18 = sbr.rel (%p16) target = $region8
  $region5: #{sinenet_forward.1} parent=0 // loop_body
    %s20 = ssub.s32 %s15, 1
    %s21 = ssub.s32 %s15, 2
    %s22 = sadd.s32 %s15, 1
    %s23 = ssub.s32 %s15, %s22
    %p24 = scmp.eq.s32.totalorder %s23, 0
    %s26 = sadd.s32 %s25, 1
    %s27 = scalar_select %p24, %s25, %s26
    %p30 = pneg %p24
    %p31 = scmp.eq.s32.totalorder %s15, 1
    %p32 = por %p30, %p31
    %p33 = scmp.ne.s32.totalorder %s25, %s28
    %p34 = scmp.eq.s32.totalorder %s15, 0
    %p35 = por %p33, %p34
    %p36 = scmp.ne.s32.totalorder %s25, %s28
    %p37 = scmp.eq.s32.totalorder %s20, 1
    %p38 = por %p36, %p37
    %p39 = scmp.ne.s32.totalorder %s28, %s29
    %p40 = scmp.eq.s32.totalorder %s20, 0
    %p41 = por %p39, %p40
    %p42 = scmp.ne.s32.totalorder %s28, %s29
    %p43 = scmp.eq.s32.totalorder %s21, 1
    %p44 = por %p42, %p43
    %p46 = scmp.ne.s32.totalorder %s29, %s45
    %p47 = scmp.eq.s32.totalorder %s21, 0
    %p48 = por %p46, %p47
    %s50 = sadd.s32 %s49, 1
    %p53 = scmp.eq.s32.totalorder %s15, 1
    %p54 = scmp.ne.s32.totalorder %s49, %s51
    %p55 = scmp.eq.s32.totalorder %s15, 0
    %p56 = por %p54, %p55
    %p57 = scmp.ne.s32.totalorder %s49, %s51
    %p58 = scmp.eq.s32.totalorder %s20, 1
    %p59 = por %p57, %p58
    %p60 = scmp.ne.s32.totalorder %s51, %s52
    %p61 = scmp.eq.s32.totalorder %s20, 0
    %p62 = por %p60, %p61
    %p63 = scmp.ne.s32.totalorder %s51, %s52
    %p64 = scmp.eq.s32.totalorder %s21, 1
    %p65 = por %p63, %p64
    %p67 = scmp.ne.s32.totalorder %s52, %s66
    %p68 = scmp.eq.s32.totalorder %s21, 0
    %p69 = por %p67, %p68
    %s71 = sadd.s32 %s70, 1
    %p74 = scmp.eq.s32.totalorder %s15, 1
    %p75 = scmp.ne.s32.totalorder %s70, %s72
    %p76 = scmp.eq.s32.totalorder %s15, 0
    %p77 = por %p75, %p76
    %p78 = scmp.ne.s32.totalorder %s70, %s72
    %p79 = scmp.eq.s32.totalorder %s20, 1
    %p80 = por %p78, %p79
    %p81 = scmp.ne.s32.totalorder %s72, %s73
    %p82 = scmp.eq.s32.totalorder %s20, 0
    %p83 = por %p81, %p82
    %p84 = scmp.ne.s32.totalorder %s72, %s73
    %p85 = scmp.eq.s32.totalorder %s21, 1
    %p86 = por %p84, %p85
    %p88 = scmp.ne.s32.totalorder %s73, %s87
    %p89 = scmp.eq.s32.totalorder %s21, 0
    %p90 = por %p88, %p89
    %s92 = sadd.s32 %s91, 1
    %p95 = scmp.eq.s32.totalorder %s15, 1
    %p96 = scmp.ne.s32.totalorder %s91, %s93
    %p97 = scmp.eq.s32.totalorder %s15, 0
    %p98 = por %p96, %p97
    %p99 = scmp.ne.s32.totalorder %s91, %s93
    %p100 = scmp.eq.s32.totalorder %s20, 1
    %p101 = por %p99, %p100
    %p102 = scmp.ne.s32.totalorder %s93, %s94
    %p103 = scmp.eq.s32.totalorder %s20, 0
    %p104 = por %p102, %p103
    %p105 = scmp.ne.s32.totalorder %s93, %s94
    %p106 = scmp.eq.s32.totalorder %s21, 1
    %p107 = por %p105, %p106
    %p109 = scmp.ne.s32.totalorder %s94, %s108
    %p110 = scmp.eq.s32.totalorder %s21, 0
    %p111 = por %p109, %p110
    %s113 = sadd.s32 %s112, 1
    %p116 = scmp.eq.s32.totalorder %s15, 1
    %p117 = scmp.ne.s32.totalorder %s112, %s114
    %p118 = scmp.eq.s32.totalorder %s15, 0
    %p119 = por %p117, %p118
    %p120 = scmp.ne.s32.totalorder %s112, %s114
    %p121 = scmp.eq.s32.totalorder %s20, 1
    %p122 = por %p120, %p121
    %p123 = scmp.ne.s32.totalorder %s114, %s115
    %p124 = scmp.eq.s32.totalorder %s20, 0
    %p125 = por %p123, %p124
    %p126 = scmp.ne.s32.totalorder %s114, %s115
    %p127 = scmp.eq.s32.totalorder %s21, 1
    %p128 = por %p126, %p127
    %p130 = scmp.ne.s32.totalorder %s115, %s129
    %p131 = scmp.eq.s32.totalorder %s21, 0
    %p132 = por %p130, %p131
    %s134 = sadd.s32 %s133, 1
    %p137 = scmp.eq.s32.totalorder %s15, 1
    %p138 = scmp.ne.s32.totalorder %s133, %s135
    %p139 = scmp.eq.s32.totalorder %s15, 0
    %p140 = por %p138, %p139
    %p141 = scmp.ne.s32.totalorder %s133, %s135
    %p142 = scmp.eq.s32.totalorder %s20, 1
    %p143 = por %p141, %p142
    %p144 = scmp.ne.s32.totalorder %s135, %s136
    %p145 = scmp.eq.s32.totalorder %s20, 0
    %p146 = por %p144, %p145
    %p147 = scmp.ne.s32.totalorder %s135, %s136
    %p148 = scmp.eq.s32.totalorder %s21, 1
    %p149 = por %p147, %p148
    %p151 = scmp.ne.s32.totalorder %s136, %s150
    %p152 = scmp.eq.s32.totalorder %s21, 0
    %p153 = por %p151, %p152
    %s155 = sadd.s32 %s154, 1
    %p158 = scmp.eq.s32.totalorder %s15, 1
    %p159 = scmp.ne.s32.totalorder %s154, %s156
    %p160 = scmp.eq.s32.totalorder %s15, 0
    %p161 = por %p159, %p160
    %p162 = scmp.ne.s32.totalorder %s154, %s156
    %p163 = scmp.eq.s32.totalorder %s20, 1
    %p164 = por %p162, %p163
    %p165 = scmp.ne.s32.totalorder %s156, %s157
    %p166 = scmp.eq.s32.totalorder %s20, 0
    %p167 = por %p165, %p166
    %p168 = scmp.ne.s32.totalorder %s156, %s157
    %p169 = scmp.eq.s32.totalorder %s21, 1
    %p170 = por %p168, %p169
    %p172 = scmp.ne.s32.totalorder %s157, %s171
    %p173 = scmp.eq.s32.totalorder %s21, 0
    %p174 = por %p172, %p173
    %s175 = ssub.s32 %s15, %s22
    %p176 = scmp.eq.s32.totalorder %s175, 0
    %s178 = sadd.s32 %s177, 1
    %s179 = scalar_select %p176, %s177, %s178
    %p182 = pneg %p176
    %p183 = scmp.eq.s32.totalorder %s15, 1
    %p184 = por %p182, %p183
    %p185 = scmp.ne.s32.totalorder %s177, %s180
    %p186 = scmp.eq.s32.totalorder %s15, 0
    %p187 = por %p185, %p186
    %p188 = scmp.ne.s32.totalorder %s177, %s180
    %p189 = scmp.eq.s32.totalorder %s20, 1
    %p190 = por %p188, %p189
    %p191 = scmp.ne.s32.totalorder %s180, %s181
    %p192 = scmp.eq.s32.totalorder %s20, 0
    %p193 = por %p191, %p192
    %p194 = scmp.ne.s32.totalorder %s180, %s181
    %p195 = scmp.eq.s32.totalorder %s21, 1
    %p196 = por %p194, %p195
    %p198 = scmp.ne.s32.totalorder %s181, %s197
    %p199 = scmp.eq.s32.totalorder %s21, 0
    %p200 = por %p198, %p199
    %p201 = scmp.le.s32.totalorder 1, %s15
    %p202 = scmp.lt.s32.totalorder %s15, 3
    %p203 = pnand %p201, %p202
    %p204 = pneg %p203
    // Predicated region
    $region9: #{sinenet_forward.1} parent=5 // pred_check
      _
    $region10: #{sinenet_forward.1} parent=5 // pred_check_branch
      %206 = sbr.rel (%p203) target = $region12
    $region11: #{sinenet_forward.1} parent=5 // pred_region
      %s207 = ssub.s32 %s15, 1
      // Predicated region
      $region13: #{sinenet_forward.1} parent=11 // pred_check
        %p208 = pneg %p62
      $region14: #{sinenet_forward.1} parent=11 // pred_check_branch
        %210 = sbr.rel (%p208) target = $region16
      $region15: #{sinenet_forward.1} parent=11 // pred_region
        _
      $region16: #{sinenet_forward.1} parent=11 // pred_fallthru
        _
      // Predicated region
      $region17: #{sinenet_forward.1} parent=11 // pred_check
        %p211 = pneg %p83
      $region18: #{sinenet_forward.1} parent=11 // pred_check_branch
        %213 = sbr.rel (%p211) target = $region20
      $region19: #{sinenet_forward.1} parent=11 // pred_region
        _
      $region20: #{sinenet_forward.1} parent=11 // pred_fallthru
        _
      // Predicated region
      $region21: #{sinenet_forward.1} parent=11 // pred_check
        %p214 = pneg %p104
      $region22: #{sinenet_forward.1} parent=11 // pred_check_branch
        %216 = sbr.rel (%p214) target = $region24
      $region23: #{sinenet_forward.1} parent=11 // pred_region
        _
      $region24: #{sinenet_forward.1} parent=11 // pred_fallthru
        _
      // Predicated region
      $region25: #{sinenet_forward.1} parent=11 // pred_check
        %p217 = pneg %p125
      $region26: #{sinenet_forward.1} parent=11 // pred_check_branch
        %219 = sbr.rel (%p217) target = $region28
      $region27: #{sinenet_forward.1} parent=11 // pred_region
        _
      $region28: #{sinenet_forward.1} parent=11 // pred_fallthru
        _
      // Predicated region
      $region29: #{sinenet_forward.1} parent=11 // pred_check
        %p220 = pneg %p146
      $region30: #{sinenet_forward.1} parent=11 // pred_check_branch
        %222 = sbr.rel (%p220) target = $region32
      $region31: #{sinenet_forward.1} parent=11 // pred_region
        _
      $region32: #{sinenet_forward.1} parent=11 // pred_fallthru
        _
      // Predicated region
      $region33: #{sinenet_forward.1} parent=11 // pred_check
        %p223 = pneg %p167
      $region34: #{sinenet_forward.1} parent=11 // pred_check_branch
        %225 = sbr.rel (%p223) target = $region36
      $region35: #{sinenet_forward.1} parent=11 // pred_region
        _
      $region36: #{sinenet_forward.1} parent=11 // pred_fallthru
        _
    $region12: #{sinenet_forward.1} parent=5 // pred_fallthru
      _
    %p226 = scmp.lt.s32.totalorder %s15, 2
    // Predicated region
    $region37: #{sinenet_forward.1} parent=5 // pred_check
      %p227 = pneg %p226
    $region38: #{sinenet_forward.1} parent=5 // pred_check_branch
      %229 = sbr.rel (%p227) target = $region40
    $region39: #{sinenet_forward.1} parent=5 // pred_region
      // Predicated region
      $region41: #{sinenet_forward.1} parent=39 // pred_check
        %p230 = pneg %p35
      $region42: #{sinenet_forward.1} parent=39 // pred_check_branch
        %232 = sbr.rel (%p230) target = $region44
      $region43: #{sinenet_forward.1} parent=39 // pred_region
        %s233 = smul.u32 4, %s15
        %p234 = scmp.lt.s32.totalorder %s233, 7
        %s235 = scalar_select %p234, %s233, 7
        %s236 = scalar_lea.vmem %s0, %s235
        %s237 = smul.u32 4, %s15
      $region44: #{sinenet_forward.1} parent=39 // pred_fallthru
        _
    $region40: #{sinenet_forward.1} parent=5 // pred_fallthru
      _
    %p238 = scmp.le.s32.totalorder 1, %s15
    %p239 = scmp.lt.s32.totalorder %s15, 3
    %p240 = pnand %p238, %p239
    %p241 = pneg %p240
    // Predicated region
    $region45: #{sinenet_forward.1} parent=5 // pred_check
      _
    $region46: #{sinenet_forward.1} parent=5 // pred_check_branch
      %243 = sbr.rel (%p240) target = $region48
    $region47: #{sinenet_forward.1} parent=5 // pred_region
      %s244 = ssub.s32 %s15, 1
      %s245 = smul.u32 4, %s20
      %p246 = scmp.lt.s32.totalorder %s245, 7
      %s247 = scalar_select %p246, %s245, 7
      %s248 = scalar_lea.vmem %s0, %s247
      %p249 = pneg %p41
      %p250 = pneg %p38
      %p251 = pneg %p62
      %p252 = pneg %p59
      %p253 = pneg %p83
      %p254 = pneg %p80
      %p255 = pneg %p104
      %p256 = pneg %p101
      %p257 = pneg %p125
      %p258 = pneg %p122
      %p259 = pneg %p146
      %p260 = pneg %p143
      %p261 = pneg %p167
      %p262 = pneg %p164
      %p263 = pneg %p193
      %p264 = pneg %p190
      %s265 = smul.u32 4, %s20
      %p266 = scmp.lt.s32.totalorder %s265, 7
      %s267 = scalar_select %p266, %s265, 7
      %s268 = scalar_lea.vmem %s7, %s267
      %s269 = smul.u32 4, %s20
      %p270 = scmp.lt.s32.totalorder %s269, 7
      %s271 = scalar_select %p270, %s269, 7
      %s272 = scalar_lea.vmem %s0, %s271
      %s273 = smul.u32 4, %s20
      %s274 = smul.u32 4, %s20
      %p275 = scmp.lt.s32.totalorder %s274, 7
      %s276 = scalar_select %p275, %s274, 7
      %s277 = scalar_lea.vmem %s7, %s276
      %s278 = smul.u32 4, %s20
      %v279 = vld [vmem:[%s272] sm:$0xf]
      %v280 = vld [vmem:[%s1] sm:$0xff]
      %v281 = vld [vmem:[%s1 + $0x8] sm:$0xff]
      %v282 = vld [vmem:[%s1 + $0x10] sm:$0xff]
      %v283 = vld [vmem:[%s1 + $0x18] sm:$0xff]
      %v284 = vld [vmem:[%s1 + $0x20] sm:$0xff]
      %v285 = vld [vmem:[%s1 + $0x28] sm:$0xff]
      %v286 = vld [vmem:[%s1 + $0x30] sm:$0xff]
      %v287 = vld [vmem:[%s1 + $0x38] sm:$0xff]
      %289 = vset.pattern.permute.xlu0 0
      %290 = vperm.xlu0 %289, %v280
      %v291 = vpop.permute.xlu0 %290
      %294 = vset.pattern.permute.xlu0 0
      %295 = vperm.xlu0 %294, %v281
      %v296 = vpop.permute.xlu0 %295
      %299 = vset.pattern.permute.xlu0 0
      %300 = vperm.xlu0 %299, %v282
      %v301 = vpop.permute.xlu0 %300
      %304 = vset.pattern.permute.xlu0 0
      %305 = vperm.xlu0 %304, %v283
      %v306 = vpop.permute.xlu0 %305
      %309 = vset.pattern.permute.xlu0 0
      %310 = vperm.xlu0 %309, %v284
      %v311 = vpop.permute.xlu0 %310
      %314 = vset.pattern.permute.xlu0 0
      %315 = vperm.xlu0 %314, %v285
      %v316 = vpop.permute.xlu0 %315
      %319 = vset.pattern.permute.xlu0 0
      %320 = vperm.xlu0 %319, %v286
      %v321 = vpop.permute.xlu0 %320
      %324 = vset.pattern.permute.xlu0 0
      %325 = vperm.xlu0 %324, %v287
      %v326 = vpop.permute.xlu0 %325
      %v329 = vperm.slane %v279, 0
      %v330 = vperm.slane %v279, 1
      %v331 = vperm.slane %v279, 2
      %v332 = vperm.slane %v279, 3
      %v337 = vmul.f32 %v291, %v329
      %v338 = vmul.f32 %v291, %v330
      %v339 = vmul.f32 %v291, %v331
      %v340 = vmul.f32 %v291, %v332
      %v341 = vmul.f32 %v296, %v329
      %v342 = vmul.f32 %v296, %v330
      %v343 = vmul.f32 %v296, %v331
      %v344 = vmul.f32 %v296, %v332
      %v345 = vmul.f32 %v301, %v329
      %v346 = vmul.f32 %v301, %v330
      %v347 = vmul.f32 %v301, %v331
      %v348 = vmul.f32 %v301, %v332
      %v349 = vmul.f32 %v306, %v329
      %v350 = vmul.f32 %v306, %v330
      %v351 = vmul.f32 %v306, %v331
      %v352 = vmul.f32 %v306, %v332
      %v353 = vmul.f32 %v311, %v329
      %v354 = vmul.f32 %v311, %v330
      %v355 = vmul.f32 %v311, %v331
      %v356 = vmul.f32 %v311, %v332
      %v357 = vmul.f32 %v316, %v329
      %v358 = vmul.f32 %v316, %v330
      %v359 = vmul.f32 %v316, %v331
      %v360 = vmul.f32 %v316, %v332
      %v361 = vmul.f32 %v321, %v329
      %v362 = vmul.f32 %v321, %v330
      %v363 = vmul.f32 %v321, %v331
      %v364 = vmul.f32 %v321, %v332
      %v365 = vmul.f32 %v326, %v329
      %v366 = vmul.f32 %v326, %v330
      %v367 = vmul.f32 %v326, %v331
      %v368 = vmul.f32 %v326, %v332
      %v369 = vld [vmem:[%s2] sm:$0xff]
      %v370 = vld [vmem:[%s2 + $0x8] sm:$0xff]
      %v371 = vld [vmem:[%s2 + $0x10] sm:$0xff]
      %v372 = vld [vmem:[%s2 + $0x18] sm:$0xff]
      %v373 = vld [vmem:[%s2 + $0x20] sm:$0xff]
      %v374 = vld [vmem:[%s2 + $0x28] sm:$0xff]
      %v375 = vld [vmem:[%s2 + $0x30] sm:$0xff]
      %v376 = vld [vmem:[%s2 + $0x38] sm:$0xff]
      %378 = vset.pattern.permute.xlu0 0
      %379 = vperm.xlu0 %378, %v369
      %v380 = vpop.permute.xlu0 %379
      %383 = vset.pattern.permute.xlu0 0
      %384 = vperm.xlu0 %383, %v370
      %v385 = vpop.permute.xlu0 %384
      %388 = vset.pattern.permute.xlu0 0
      %389 = vperm.xlu0 %388, %v371
      %v390 = vpop.permute.xlu0 %389
      %393 = vset.pattern.permute.xlu0 0
      %394 = vperm.xlu0 %393, %v372
      %v395 = vpop.permute.xlu0 %394
      %398 = vset.pattern.permute.xlu0 0
      %399 = vperm.xlu0 %398, %v373
      %v400 = vpop.permute.xlu0 %399
      %403 = vset.pattern.permute.xlu0 0
      %404 = vperm.xlu0 %403, %v374
      %v405 = vpop.permute.xlu0 %404
      %408 = vset.pattern.permute.xlu0 0
      %409 = vperm.xlu0 %408, %v375
      %v410 = vpop.permute.xlu0 %409
      %413 = vset.pattern.permute.xlu0 0
      %414 = vperm.xlu0 %413, %v376
      %v415 = vpop.permute.xlu0 %414
      %v417 = vadd.f32 %v337, %v380
      %v418 = vadd.f32 %v338, %v380
      %v419 = vadd.f32 %v339, %v380
      %v420 = vadd.f32 %v340, %v380
      %v421 = vadd.f32 %v341, %v385
      %v422 = vadd.f32 %v342, %v385
      %v423 = vadd.f32 %v343, %v385
      %v424 = vadd.f32 %v344, %v385
      %v425 = vadd.f32 %v345, %v390
      %v426 = vadd.f32 %v346, %v390
      %v427 = vadd.f32 %v347, %v390
      %v428 = vadd.f32 %v348, %v390
      %v429 = vadd.f32 %v349, %v395
      %v430 = vadd.f32 %v350, %v395
      %v431 = vadd.f32 %v351, %v395
      %v432 = vadd.f32 %v352, %v395
      %v433 = vadd.f32 %v353, %v400
      %v434 = vadd.f32 %v354, %v400
      %v435 = vadd.f32 %v355, %v400
      %v436 = vadd.f32 %v356, %v400
      %v437 = vadd.f32 %v357, %v405
      %v438 = vadd.f32 %v358, %v405
      %v439 = vadd.f32 %v359, %v405
      %v440 = vadd.f32 %v360, %v405
      %v441 = vadd.f32 %v361, %v410
      %v442 = vadd.f32 %v362, %v410
      %v443 = vadd.f32 %v363, %v410
      %v444 = vadd.f32 %v364, %v410
      %v445 = vadd.f32 %v365, %v415
      %v446 = vadd.f32 %v366, %v415
      %v447 = vadd.f32 %v367, %v415
      %v448 = vadd.f32 %v368, %v415
      %v449 = vmax.f32 %v417, 0.0
      %v450 = vmax.f32 %v418, 0.0
      %v451 = vmax.f32 %v419, 0.0
      %v452 = vmax.f32 %v420, 0.0
      %v453 = vmax.f32 %v421, 0.0
      %v454 = vmax.f32 %v422, 0.0
      %v455 = vmax.f32 %v423, 0.0
      %v456 = vmax.f32 %v424, 0.0
      %v457 = vmax.f32 %v425, 0.0
      %v458 = vmax.f32 %v426, 0.0
      %v459 = vmax.f32 %v427, 0.0
      %v460 = vmax.f32 %v428, 0.0
      %v461 = vmax.f32 %v429, 0.0
      %v462 = vmax.f32 %v430, 0.0
      %v463 = vmax.f32 %v431, 0.0
      %v464 = vmax.f32 %v432, 0.0
      %v465 = vmax.f32 %v433, 0.0
      %v466 = vmax.f32 %v434, 0.0
      %v467 = vmax.f32 %v435, 0.0
      %v468 = vmax.f32 %v436, 0.0
      %v469 = vmax.f32 %v437, 0.0
      %v470 = vmax.f32 %v438, 0.0
      %v471 = vmax.f32 %v439, 0.0
      %v472 = vmax.f32 %v440, 0.0
      %v473 = vmax.f32 %v441, 0.0
      %v474 = vmax.f32 %v442, 0.0
      %v475 = vmax.f32 %v443, 0.0
      %v476 = vmax.f32 %v444, 0.0
      %v477 = vmax.f32 %v445, 0.0
      %v478 = vmax.f32 %v446, 0.0
      %v479 = vmax.f32 %v447, 0.0
      %v480 = vmax.f32 %v448, 0.0
      %v481 = vld [vmem:[%s3] sm:$0xff]
      %v482 = vld [vmem:[%s3 + $0x8] sm:$0xff]
      %v483 = vld [vmem:[%s3 + $0x10] sm:$0xff]
      %v484 = vld [vmem:[%s3 + $0x18] sm:$0xff]
      %v485 = vld [vmem:[%s3 + $0x20] sm:$0xff]
      %v486 = vld [vmem:[%s3 + $0x28] sm:$0xff]
      %v487 = vld [vmem:[%s3 + $0x30] sm:$0xff]
      %v488 = vld [vmem:[%s3 + $0x38] sm:$0xff]
      %v489 = vld [vmem:[%s4] sm:$0xff]
      %v490 = vld [vmem:[%s4 + $0x8] sm:$0xff]
      %v491 = vld [vmem:[%s4 + $0x10] sm:$0xff]
      %v492 = vld [vmem:[%s4 + $0x18] sm:$0xff]
      %v493 = vld [vmem:[%s4 + $0x20] sm:$0xff]
      %v494 = vld [vmem:[%s4 + $0x28] sm:$0xff]
      %v495 = vld [vmem:[%s4 + $0x30] sm:$0xff]
      %v496 = vld [vmem:[%s4 + $0x38] sm:$0xff]
      %498 = vset.pattern.permute.xlu0 0
      %499 = vperm.xlu0 %498, %v489
      %v500 = vpop.permute.xlu0 %499
      %503 = vset.pattern.permute.xlu0 0
      %504 = vperm.xlu0 %503, %v490
      %v505 = vpop.permute.xlu0 %504
      %508 = vset.pattern.permute.xlu0 0
      %509 = vperm.xlu0 %508, %v491
      %v510 = vpop.permute.xlu0 %509
      %513 = vset.pattern.permute.xlu0 0
      %514 = vperm.xlu0 %513, %v492
      %v515 = vpop.permute.xlu0 %514
      %518 = vset.pattern.permute.xlu0 0
      %519 = vperm.xlu0 %518, %v493
      %v520 = vpop.permute.xlu0 %519
      %523 = vset.pattern.permute.xlu0 0
      %524 = vperm.xlu0 %523, %v494
      %v525 = vpop.permute.xlu0 %524
      %528 = vset.pattern.permute.xlu0 0
      %529 = vperm.xlu0 %528, %v495
      %v530 = vpop.permute.xlu0 %529
      %533 = vset.pattern.permute.xlu0 0
      %534 = vperm.xlu0 %533, %v496
      %v535 = vpop.permute.xlu0 %534
      %vm537 = vcmask 523264
      %v539 = vsel %vm537, %v481, 0
      %v542 = vsel %vm537, %v482, 0
      %v545 = vsel %vm537, %v483, 0
      %v548 = vsel %vm537, %v484, 0
      %v551 = vsel %vm537, %v485, 0
      %v554 = vsel %vm537, %v486, 0
      %v557 = vsel %vm537, %v487, 0
      %v560 = vsel %vm537, %v488, 0
      %562 = vmatpush.msra.mxu0 0.0
      %563 = vmatpush.msra.mxu0 0.0
      %564 = vmatpush.msra.mxu0 0.0
      %565 = vmatpush.msra.mxu0 0.0
      %566 = vmatpush.msra.mxu0 0.0
      %567 = vmatpush.msra.mxu0 0.0
      %568 = vmatpush.msra.mxu0 0.0
      %569 = vmatpush.msra.mxu0 0.0
      %570 = vmatpush.msra.mxu0 %v477
      %571 = vmatpush.msra.mxu0 %v473
      %572 = vmatpush.msra.mxu0 %v469
      %573 = vmatpush.msra.mxu0 %v465
      %574 = vmatpush.msra.mxu0 %v461
      %575 = vmatpush.msra.mxu0 %v457
      %576 = vmatpush.msra.mxu0 %v453
      %577 = vmatpush.msra.mxu0 %v449
      %578 = vmatmul.f32.gmra.mxu0 %v539
      %v579 = vpop.f32.mrf.mxu0
      %v580 = vadd.f32 %v500, %v579
      %581 = vmatmul.f32.gmra.mxu0 %v542
      %v582 = vpop.f32.mrf.mxu0
      %v583 = vadd.f32 %v505, %v582
      %584 = vmatmul.f32.gmra.mxu0 %v545
      %v585 = vpop.f32.mrf.mxu0
      %v586 = vadd.f32 %v510, %v585
      %587 = vmatmul.f32.gmra.mxu0 %v548
      %v588 = vpop.f32.mrf.mxu0
      %v589 = vadd.f32 %v515, %v588
      %590 = vmatmul.f32.gmra.mxu0 %v551
      %v591 = vpop.f32.mrf.mxu0
      %v592 = vadd.f32 %v520, %v591
      %593 = vmatmul.f32.gmra.mxu0 %v554
      %v594 = vpop.f32.mrf.mxu0
      %v595 = vadd.f32 %v525, %v594
      %596 = vmatmul.f32.gmra.mxu0 %v557
      %v597 = vpop.f32.mrf.mxu0
      %v598 = vadd.f32 %v530, %v597
      %599 = vmatmul.f32.gmra.mxu0 %v560
      %v600 = vpop.f32.mrf.mxu0
      %v601 = vadd.f32 %v535, %v600
      %602 = vdwg.mxu0
      %603 = vmatpush.msra.mxu0 0.0
      %604 = vmatpush.msra.mxu0 0.0
      %605 = vmatpush.msra.mxu0 0.0
      %606 = vmatpush.msra.mxu0 0.0
      %607 = vmatpush.msra.mxu0 0.0
      %608 = vmatpush.msra.mxu0 0.0
      %609 = vmatpush.msra.mxu0 0.0
      %610 = vmatpush.msra.mxu0 0.0
      %611 = vmatpush.msra.mxu0 %v478
      %612 = vmatpush.msra.mxu0 %v474
      %613 = vmatpush.msra.mxu0 %v470
      %614 = vmatpush.msra.mxu0 %v466
      %615 = vmatpush.msra.mxu0 %v462
      %616 = vmatpush.msra.mxu0 %v458
      %617 = vmatpush.msra.mxu0 %v454
      %618 = vmatpush.msra.mxu0 %v450
      %619 = vmatmul.f32.gmra.mxu0 %v539
      %v620 = vpop.f32.mrf.mxu0
      %v621 = vadd.f32 %v500, %v620
      %622 = vmatmul.f32.gmra.mxu0 %v542
      %v623 = vpop.f32.mrf.mxu0
      %v624 = vadd.f32 %v505, %v623
      %625 = vmatmul.f32.gmra.mxu0 %v545
      %v626 = vpop.f32.mrf.mxu0
      %v627 = vadd.f32 %v510, %v626
      %628 = vmatmul.f32.gmra.mxu0 %v548
      %v629 = vpop.f32.mrf.mxu0
      %v630 = vadd.f32 %v515, %v629
      %631 = vmatmul.f32.gmra.mxu0 %v551
      %v632 = vpop.f32.mrf.mxu0
      %v633 = vadd.f32 %v520, %v632
      %634 = vmatmul.f32.gmra.mxu0 %v554
      %v635 = vpop.f32.mrf.mxu0
      %v636 = vadd.f32 %v525, %v635
      %637 = vmatmul.f32.gmra.mxu0 %v557
      %v638 = vpop.f32.mrf.mxu0
      %v639 = vadd.f32 %v530, %v638
      %640 = vmatmul.f32.gmra.mxu0 %v560
      %v641 = vpop.f32.mrf.mxu0
      %v642 = vadd.f32 %v535, %v641
      %643 = vdwg.mxu0
      %644 = vmatpush.msra.mxu0 0.0
      %645 = vmatpush.msra.mxu0 0.0
      %646 = vmatpush.msra.mxu0 0.0
      %647 = vmatpush.msra.mxu0 0.0
      %648 = vmatpush.msra.mxu0 0.0
      %649 = vmatpush.msra.mxu0 0.0
      %650 = vmatpush.msra.mxu0 0.0
      %651 = vmatpush.msra.mxu0 0.0
      %652 = vmatpush.msra.mxu0 %v479
      %653 = vmatpush.msra.mxu0 %v475
      %654 = vmatpush.msra.mxu0 %v471
      %655 = vmatpush.msra.mxu0 %v467
      %656 = vmatpush.msra.mxu0 %v463
      %657 = vmatpush.msra.mxu0 %v459
      %658 = vmatpush.msra.mxu0 %v455
      %659 = vmatpush.msra.mxu0 %v451
      %660 = vmatmul.f32.gmra.mxu0 %v539
      %v661 = vpop.f32.mrf.mxu0
      %v662 = vadd.f32 %v500, %v661
      %663 = vmatmul.f32.gmra.mxu0 %v542
      %v664 = vpop.f32.mrf.mxu0
      %v665 = vadd.f32 %v505, %v664
      %666 = vmatmul.f32.gmra.mxu0 %v545
      %v667 = vpop.f32.mrf.mxu0
      %v668 = vadd.f32 %v510, %v667
      %669 = vmatmul.f32.gmra.mxu0 %v548
      %v670 = vpop.f32.mrf.mxu0
      %v671 = vadd.f32 %v515, %v670
      %672 = vmatmul.f32.gmra.mxu0 %v551
      %v673 = vpop.f32.mrf.mxu0
      %v674 = vadd.f32 %v520, %v673
      %675 = vmatmul.f32.gmra.mxu0 %v554
      %v676 = vpop.f32.mrf.mxu0
      %v677 = vadd.f32 %v525, %v676
      %678 = vmatmul.f32.gmra.mxu0 %v557
      %v679 = vpop.f32.mrf.mxu0
      %v680 = vadd.f32 %v530, %v679
      %681 = vmatmul.f32.gmra.mxu0 %v560
      %v682 = vpop.f32.mrf.mxu0
      %v683 = vadd.f32 %v535, %v682
      %684 = vdwg.mxu0
      %685 = vmatpush.msra.mxu0 0.0
      %686 = vmatpush.msra.mxu0 0.0
      %687 = vmatpush.msra.mxu0 0.0
      %688 = vmatpush.msra.mxu0 0.0
      %689 = vmatpush.msra.mxu0 0.0
      %690 = vmatpush.msra.mxu0 0.0
      %691 = vmatpush.msra.mxu0 0.0
      %692 = vmatpush.msra.mxu0 0.0
      %693 = vmatpush.msra.mxu0 %v480
      %694 = vmatpush.msra.mxu0 %v476
      %695 = vmatpush.msra.mxu0 %v472
      %696 = vmatpush.msra.mxu0 %v468
      %697 = vmatpush.msra.mxu0 %v464
      %698 = vmatpush.msra.mxu0 %v460
      %699 = vmatpush.msra.mxu0 %v456
      %700 = vmatpush.msra.mxu0 %v452
      %701 = vmatmul.f32.gmra.mxu0 %v539
      %v702 = vpop.f32.mrf.mxu0
      %v703 = vadd.f32 %v500, %v702
      %704 = vmatmul.f32.gmra.mxu0 %v542
      %v705 = vpop.f32.mrf.mxu0
      %v706 = vadd.f32 %v505, %v705
      %707 = vmatmul.f32.gmra.mxu0 %v545
      %v708 = vpop.f32.mrf.mxu0
      %v709 = vadd.f32 %v510, %v708
      %710 = vmatmul.f32.gmra.mxu0 %v548
      %v711 = vpop.f32.mrf.mxu0
      %v712 = vadd.f32 %v515, %v711
      %713 = vmatmul.f32.gmra.mxu0 %v551
      %v714 = vpop.f32.mrf.mxu0
      %v715 = vadd.f32 %v520, %v714
      %716 = vmatmul.f32.gmra.mxu0 %v554
      %v717 = vpop.f32.mrf.mxu0
      %v718 = vadd.f32 %v525, %v717
      %719 = vmatmul.f32.gmra.mxu0 %v557
      %v720 = vpop.f32.mrf.mxu0
      %v721 = vadd.f32 %v530, %v720
      %722 = vmatmul.f32.gmra.mxu0 %v560
      %v723 = vpop.f32.mrf.mxu0
      %v724 = vadd.f32 %v535, %v723
      %725 = vdwg.mxu0
      %v726 = vmax.f32 %v580, 0.0
      %v727 = vmax.f32 %v621, 0.0
      %v728 = vmax.f32 %v662, 0.0
      %v729 = vmax.f32 %v703, 0.0
      %v730 = vmax.f32 %v583, 0.0
      %v731 = vmax.f32 %v624, 0.0
      %v732 = vmax.f32 %v665, 0.0
      %v733 = vmax.f32 %v706, 0.0
      %v734 = vmax.f32 %v586, 0.0
      %v735 = vmax.f32 %v627, 0.0
      %v736 = vmax.f32 %v668, 0.0
      %v737 = vmax.f32 %v709, 0.0
      %v738 = vmax.f32 %v589, 0.0
      %v739 = vmax.f32 %v630, 0.0
      %v740 = vmax.f32 %v671, 0.0
      %v741 = vmax.f32 %v712, 0.0
      %v742 = vmax.f32 %v592, 0.0
      %v743 = vmax.f32 %v633, 0.0
      %v744 = vmax.f32 %v674, 0.0
      %v745 = vmax.f32 %v715, 0.0
      %v746 = vmax.f32 %v595, 0.0
      %v747 = vmax.f32 %v636, 0.0
      %v748 = vmax.f32 %v677, 0.0
      %v749 = vmax.f32 %v718, 0.0
      %v750 = vmax.f32 %v598, 0.0
      %v751 = vmax.f32 %v639, 0.0
      %v752 = vmax.f32 %v680, 0.0
      %v753 = vmax.f32 %v721, 0.0
      %v754 = vmax.f32 %v601, 0.0
      %v755 = vmax.f32 %v642, 0.0
      %v756 = vmax.f32 %v683, 0.0
      %v757 = vmax.f32 %v724, 0.0
      %v758 = vld [vmem:[%s5] sm:$0xff]
      %v759 = vld [vmem:[%s5 + $0x8] sm:$0xff]
      %v760 = vld [vmem:[%s5 + $0x10] sm:$0xff]
      %v761 = vld [vmem:[%s5 + $0x18] sm:$0xff]
      %v762 = vld [vmem:[%s5 + $0x20] sm:$0xff]
      %v763 = vld [vmem:[%s5 + $0x28] sm:$0xff]
      %v764 = vld [vmem:[%s5 + $0x30] sm:$0xff]
      %v765 = vld [vmem:[%s5 + $0x38] sm:$0xff]
      %767 = vset.pattern.permute.xlu0 0
      %768 = vperm.xlu0 %767, %v758
      %v769 = vpop.permute.xlu0 %768
      %772 = vset.pattern.permute.xlu0 0
      %773 = vperm.xlu0 %772, %v759
      %v774 = vpop.permute.xlu0 %773
      %777 = vset.pattern.permute.xlu0 0
      %778 = vperm.xlu0 %777, %v760
      %v779 = vpop.permute.xlu0 %778
      %782 = vset.pattern.permute.xlu0 0
      %783 = vperm.xlu0 %782, %v761
      %v784 = vpop.permute.xlu0 %783
      %787 = vset.pattern.permute.xlu0 0
      %788 = vperm.xlu0 %787, %v762
      %v789 = vpop.permute.xlu0 %788
      %792 = vset.pattern.permute.xlu0 0
      %793 = vperm.xlu0 %792, %v763
      %v794 = vpop.permute.xlu0 %793
      %797 = vset.pattern.permute.xlu0 0
      %798 = vperm.xlu0 %797, %v764
      %v799 = vpop.permute.xlu0 %798
      %802 = vset.pattern.permute.xlu0 0
      %803 = vperm.xlu0 %802, %v765
      %v804 = vpop.permute.xlu0 %803
      %v806 = vmul.f32 %v769, %v726
      %v807 = vmul.f32 %v769, %v727
      %v808 = vmul.f32 %v769, %v728
      %v809 = vmul.f32 %v769, %v729
      %v810 = vmul.f32 %v774, %v730
      %v811 = vmul.f32 %v774, %v731
      %v812 = vmul.f32 %v774, %v732
      %v813 = vmul.f32 %v774, %v733
      %v814 = vmul.f32 %v779, %v734
      %v815 = vmul.f32 %v779, %v735
      %v816 = vmul.f32 %v779, %v736
      %v817 = vmul.f32 %v779, %v737
      %v818 = vmul.f32 %v784, %v738
      %v819 = vmul.f32 %v784, %v739
      %v820 = vmul.f32 %v784, %v740
      %v821 = vmul.f32 %v784, %v741
      %v822 = vmul.f32 %v789, %v742
      %v823 = vmul.f32 %v789, %v743
      %v824 = vmul.f32 %v789, %v744
      %v825 = vmul.f32 %v789, %v745
      %v826 = vmul.f32 %v794, %v746
      %v827 = vmul.f32 %v794, %v747
      %v828 = vmul.f32 %v794, %v748
      %v829 = vmul.f32 %v794, %v749
      %v830 = vmul.f32 %v799, %v750
      %v831 = vmul.f32 %v799, %v751
      %v832 = vmul.f32 %v799, %v752
      %v833 = vmul.f32 %v799, %v753
      %v834 = vmul.f32 %v804, %v754
      %v835 = vmul.f32 %v804, %v755
      %v836 = vmul.f32 %v804, %v756
      %v837 = vmul.f32 %v804, %v757
      %v838 = vadd.f32 %v806, %v810
      %v839 = vadd.f32 %v838, %v814
      %v840 = vadd.f32 %v839, %v818
      %v841 = vadd.f32 %v840, %v822
      %v842 = vadd.f32 %v841, %v826
      %v843 = vadd.f32 %v842, %v830
      %v844 = vadd.f32 %v843, %v834
      %v845 = vrot.slane %v844, 4
      %v846 = vadd.f32 %v844, %v845
      %v847 = vrot.slane %v846, 2
      %v848 = vadd.f32 %v846, %v847
      %v849 = vrot.slane %v848, 1
      %v850 = vadd.f32 %v848, %v849
      %v851 = vadd.f32 %v807, %v811
      %v852 = vadd.f32 %v851, %v815
      %v853 = vadd.f32 %v852, %v819
      %v854 = vadd.f32 %v853, %v823
      %v855 = vadd.f32 %v854, %v827
      %v856 = vadd.f32 %v855, %v831
      %v857 = vadd.f32 %v856, %v835
      %v858 = vrot.slane %v857, 4
      %v859 = vadd.f32 %v857, %v858
      %v860 = vrot.slane %v859, 2
      %v861 = vadd.f32 %v859, %v860
      %v862 = vrot.slane %v861, 1
      %v863 = vadd.f32 %v861, %v862
      %v864 = vadd.f32 %v808, %v812
      %v865 = vadd.f32 %v864, %v816
      %v866 = vadd.f32 %v865, %v820
      %v867 = vadd.f32 %v866, %v824
      %v868 = vadd.f32 %v867, %v828
      %v869 = vadd.f32 %v868, %v832
      %v870 = vadd.f32 %v869, %v836
      %v871 = vrot.slane %v870, 4
      %v872 = vadd.f32 %v870, %v871
      %v873 = vrot.slane %v872, 2
      %v874 = vadd.f32 %v872, %v873
      %v875 = vrot.slane %v874, 1
      %v876 = vadd.f32 %v874, %v875
      %v877 = vadd.f32 %v809, %v813
      %v878 = vadd.f32 %v877, %v817
      %v879 = vadd.f32 %v878, %v821
      %v880 = vadd.f32 %v879, %v825
      %v881 = vadd.f32 %v880, %v829
      %v882 = vadd.f32 %v881, %v833
      %v883 = vadd.f32 %v882, %v837
      %v884 = vrot.slane %v883, 4
      %v885 = vadd.f32 %v883, %v884
      %v886 = vrot.slane %v885, 2
      %v887 = vadd.f32 %v885, %v886
      %v888 = vrot.slane %v887, 1
      %v889 = vadd.f32 %v887, %v888
      %v890 = vld [vmem:[#allocation2] sm:$0x1]
      %892 = vset.pattern.permute.xlu0 0
      %893 = vperm.xlu0 %892, %v890
      %v894 = vpop.permute.xlu0 %893
      %v896 = vperm.slane %v894, 0
      %v897 = vadd.f32 %v850, %v896
      %v898 = vadd.f32 %v863, %v896
      %v899 = vadd.f32 %v876, %v896
      %v900 = vadd.f32 %v889, %v896
      %v905 = vrot.slane %v898, 7
      %v906 = vrot.slane %v899, 6
      %v907 = vrot.slane %v900, 5
      %vm908 = vcmask 1040384
      %v909 = vsel %vm908, %v897, %v905
      %vm910 = vcmask 1042434
      %v911 = vsel %vm910, %v906, %v907
      %vm912 = vcmask 1041408
      %v913 = vsel %vm912, %v909, %v911
      %v915 = vlaneseq
      %vm916 = vcmp.ge.s32.totalorder %v915, 0
      %vm917 = vcmp.lt.s32.totalorder %v915, 512
      %vm918 = vmand %vm916, %vm917
      %919 = vst.msk [vmem:[%s277] sm:$0xf] %vm918, %v913
      %s920 = smul.u32 4, %s20
      %p921 = scmp.lt.s32.totalorder %s920, 7
      %s922 = scalar_select %p921, %s920, 7
      %s923 = scalar_lea.vmem %s7, %s922
      // Predicated region
      $region49: #{sinenet_forward.1} parent=47 // pred_check
        %p924 = pneg %p190
      $region50: #{sinenet_forward.1} parent=47 // pred_check_branch
        %926 = sbr.rel (%p924) target = $region52
      $region51: #{sinenet_forward.1} parent=47 // pred_region
        %s927 = smul.u32 4, %s20
      $region52: #{sinenet_forward.1} parent=47 // pred_fallthru
        _
    $region48: #{sinenet_forward.1} parent=5 // pred_fallthru
      _
    %p928 = scmp.le.s32.totalorder 2, %s15
    // Predicated region
    $region53: #{sinenet_forward.1} parent=5 // pred_check
      %p929 = pneg %p928
    $region54: #{sinenet_forward.1} parent=5 // pred_check_branch
      %931 = sbr.rel (%p929) target = $region56
    $region55: #{sinenet_forward.1} parent=5 // pred_region
      %s932 = ssub.s32 %s15, 2
      // Predicated region
      $region57: #{sinenet_forward.1} parent=55 // pred_check
        %p933 = pneg %p196
      $region58: #{sinenet_forward.1} parent=55 // pred_check_branch
        %935 = sbr.rel (%p933) target = $region60
      $region59: #{sinenet_forward.1} parent=55 // pred_region
        %s936 = smul.u32 4, %s21
        %p937 = scmp.lt.s32.totalorder %s936, 7
        %s938 = scalar_select %p937, %s936, 7
        %s939 = scalar_lea.vmem %s7, %s938
      $region60: #{sinenet_forward.1} parent=55 // pred_fallthru
        _
    $region56: #{sinenet_forward.1} parent=5 // pred_fallthru
      _
  $region6: #{sinenet_forward.1} parent=0 // loop_footer
    %s19 = sadd.s32 1, %s15
  $region7: #{sinenet_forward.1} parent=0 // loop_footer_branch
    %14 = sbr.rel target = $region3
  $region8: #{sinenet_forward.1} parent=0 // loop_exit
    _

</llo_original>
